<compile_context>
chip_gen: v5e
topology: v5e:2x2
jax: 0.10.0
libtpu: 0.0.40
codegen_flags: <defaults>
</compile_context>

<pallas_src>
import functools
import math

import jax
import jax.numpy as jnp
from jax import lax
from jax.experimental import pallas as pl
from jax.experimental.pallas import tpu as pltpu


# ----------------------------------------------------------------------------
# helpers
# ----------------------------------------------------------------------------
def _pick_tile(dim, preferred, multiple):
    """Largest tile <= preferred that divides `dim` and is a multiple of
    `multiple`.  Searches every aligned divisor (not only power-of-two
    halvings).  Falls back to the full extent only when no aligned divisor
    exists ('equal full array dim' is always a legal BlockSpec)."""
    if dim <= preferred:
        return dim
    t = (preferred // multiple) * multiple
    while t >= multiple:
        if dim % t == 0:
            return t
        t -= multiple
    # TODO(synk): pathological dims (no aligned divisor <= preferred) fall back
    # to the full extent; a cdiv grid with a masked partial block would bound
    # VMEM here instead.
    return dim


def _vmem_limit(est_bytes):
    """Explicit scoped-VMEM limit with headroom; stays <= 48 MiB so it is safe
    on v7x (64 MiB physical) while lifting the 16/32 MiB defaults."""
    return int(min(max(2 * est_bytes + (8 << 20), 24 << 20), 48 << 20))


def _sublane_multiple(dtype):
    # bf16 packs two rows per sublane; keep the second-to-last tile dim a
    # multiple of 16 for sub-32-bit dtypes, 8 for f32.
    return 16 if jnp.dtype(dtype).itemsize < 4 else 8


# ----------------------------------------------------------------------------
# Fused multi-output linear kernel: reads x once, computes x @ w_i + b_i for
# every (w_i, b_i) pair.  Grid (M/tm, N/tn, K/tk), K innermost ("arbitrary"),
# one f32 VMEM accumulator per output.
# ----------------------------------------------------------------------------
def _fused_linear_kernel(*refs, n_out):
    x_ref = refs[0]
    w_refs = refs[1:1 + n_out]
    b_refs = refs[1 + n_out:1 + 2 * n_out]
    o_refs = refs[1 + 2 * n_out:1 + 3 * n_out]
    acc_refs = refs[1 + 3 * n_out:1 + 4 * n_out]

    k = pl.program_id(2)

    @pl.when(k == 0)
    def _():
        for acc in acc_refs:
            acc[...] = jnp.zeros_like(acc)

    # No in-kernel dtype casts: x and w are pre-cast outside (bf16 mode) so the
    # DMA moves half the bytes and the VPU does no conversion work.
    x = x_ref[...]
    for w_ref, acc in zip(w_refs, acc_refs):
        acc[...] += jnp.dot(x, w_ref[...], preferred_element_type=jnp.float32)

    @pl.when(k == pl.num_programs(2) - 1)
    def _():
        for o_ref, b_ref, acc in zip(o_refs, b_refs, acc_refs):
            o_ref[...] = (acc[...] + b_ref[...]).astype(o_ref.dtype)


def pallas_fused_linears(x2d, weights_and_biases, *, out_dtype,
                         tm_pref=512, tn_pref=512, tk_pref=512):
    """x2d: (M, K).  weights_and_biases: list of (w (K, N), b (N,)) sharing the
    same N and the same dtype as x2d.  Returns a tuple of (M, N) arrays."""
    M, K = x2d.shape
    n_out = len(weights_and_biases)
    N = weights_and_biases[0][0].shape[1]
    for w, _ in weights_and_biases:
        assert w.shape == (K, N)
        assert w.dtype == x2d.dtype, "pre-cast weights/activations to the same dtype"

    x_isz = jnp.dtype(x2d.dtype).itemsize
    o_isz = jnp.dtype(out_dtype).itemsize
    sub = _sublane_multiple(x2d.dtype)

    tm = _pick_tile(M, tm_pref, sub)
    tn = _pick_tile(N, tn_pref, 128)
    tk = _pick_tile(K, tk_pref, 128)
    grid = (M // tm, N // tn, K // tk)

    in_specs = [pl.BlockSpec((tm, tk), lambda i, j, k: (i, k))]
    args = [x2d]
    for w, _ in weights_and_biases:
        in_specs.append(pl.BlockSpec((tk, tn), lambda i, j, k: (k, j)))
        args.append(w)
    for _, b in weights_and_biases:
        in_specs.append(pl.BlockSpec((1, tn), lambda i, j, k: (0, j)))
        args.append(b.reshape(1, N).astype(jnp.float32))   # bias added in f32

    out_shapes = [jax.ShapeDtypeStruct((M, N), out_dtype) for _ in range(n_out)]
    out_specs = [pl.BlockSpec((tm, tn), lambda i, j, k: (i, j)) for _ in range(n_out)]
    scratch = [pltpu.VMEM((tm, tn), jnp.float32) for _ in range(n_out)]

    est = (2 * tm * tk * x_isz
           + n_out * (2 * tk * tn * x_isz + 2 * tn * 4
                      + 2 * tm * tn * o_isz + tm * tn * 4))

    kernel = functools.partial(_fused_linear_kernel, n_out=n_out)
    outs = pl.pallas_call(
        kernel,
        out_shape=out_shapes,
        grid=grid,
        in_specs=in_specs,
        out_specs=out_specs,
        scratch_shapes=scratch,
        compiler_params=pltpu.CompilerParams(
            dimension_semantics=("parallel", "parallel", "arbitrary"),
            vmem_limit_bytes=_vmem_limit(est)),
    )(*args)
    return tuple(outs)


# ----------------------------------------------------------------------------
# Flash-style attention kernel, reading/writing the (B, S, D) layout directly.
# Grid (B, Sq/tq, Sk/tkv); KV axis innermost ("arbitrary"); per-head online
# softmax state (m, l, acc) lives in f32 VMEM scratch.
# ----------------------------------------------------------------------------
def _attention_kernel(*refs, heads, dk, has_mask, approx_recip):
    if has_mask:
        q_ref, k_ref, v_ref, bias_ref, o_ref, m_sc, l_sc, acc_sc = refs
    else:
        q_ref, k_ref, v_ref, o_ref, m_sc, l_sc, acc_sc = refs
        bias_ref = None

    kv = pl.program_id(2)

    @pl.when(kv == 0)
    def _():
        m_sc[...] = jnp.full_like(m_sc, -jnp.inf)
        l_sc[...] = jnp.zeros_like(l_sc)
        acc_sc[...] = jnp.zeros_like(acc_sc)

    q = q_ref[0]                      # (tq,  H*dk); 1/sqrt(dk) folded into W_q
    k = k_ref[0]                      # (tkv, H*dk)
    v = v_ref[0]                      # (tkv, H*dk)
    bias = bias_ref[0] if has_mask else None   # (1, tkv) additive 0 / -1e9

    # Static per-head loop: every op is 2-D (robust Mosaic lowering); the head
    # slices are static lane slices of the already-loaded blocks.
    for h in range(heads):
        sl = slice(h * dk, (h + 1) * dk)
        qh = q[:, sl]                 # (tq,  dk)
        kh = k[:, sl]                 # (tkv, dk)
        vh = v[:, sl]                 # (tkv, dk)

        # q @ k^T without an explicit transpose: contract the trailing dk dims.
        s = lax.dot_general(qh, kh, (((1,), (1,)), ((), ())),
                            preferred_element_type=jnp.float32)    # (tq, tkv)
        if has_mask:
            s = s + bias              # single VPU add (no compare/select)

        m_prev = m_sc[h]                                            # (tq, 1)
        m_new = jnp.maximum(m_prev, jnp.max(s, axis=-1, keepdims=True))
        alpha = jnp.exp(m_prev - m_new)
        p = jnp.exp(s - m_new)
        l_sc[h] = alpha * l_sc[h] + jnp.sum(p, axis=-1, keepdims=True)
        acc_sc[h] = alpha * acc_sc[h] + jnp.dot(
            p.astype(vh.dtype), vh, preferred_element_type=jnp.float32)
        m_sc[h] = m_new

    # TODO(synk): training-mode dropout would stochastically mask `p` here.

    @pl.when(kv == pl.num_programs(2) - 1)
    def _():
        outs = []
        for h in range(heads):
            inv = pl.reciprocal(l_sc[h], approx=approx_recip)       # (tq, 1)
            outs.append((acc_sc[h] * inv).astype(o_ref.dtype))      # (tq, dk)
        # One full-width (lane-dense) store per Q block, already in the
        # (B, Sq, D) layout the output projection consumes — no XLA transpose.
        o_ref[0] = jnp.concatenate(outs, axis=-1)


def pallas_attention(q3, k3, v3, *, heads, bias=None, tq_pref=256, tkv_pref=1024):
    """q3: (B, Sq, D), k3/v3: (B, Sk, D), bias: optional (B, 1, Sk) additive
    f32 mask bias.  Returns (B, Sq, D) in the concat-head layout."""
    B, Sq, D = q3.shape
    Sk = k3.shape[1]
    dk = D // heads
    out_dtype = q3.dtype
    isz = jnp.dtype(out_dtype).itemsize
    sub = _sublane_multiple(out_dtype)

    # Keep double-buffered K/V (and Q/out) tiles bounded so the kernel fits
    # v7x's 64 MiB VMEM (32 MiB scoped default) even for large D.
    while tkv_pref > 128 and 4 * tkv_pref * D * isz > (12 << 20):
        tkv_pref //= 2
    while tq_pref > 64 and 4 * tq_pref * D * isz > (8 << 20):
        tq_pref //= 2

    tq = _pick_tile(Sq, tq_pref, sub)
    tkv = _pick_tile(Sk, tkv_pref, sub)
    # v7x megacore note: B * (Sq//tq) should be >= 2 so both TensorCores work;
    # with B >= 2 (as here) that holds automatically.
    grid = (B, Sq // tq, Sk // tkv)

    in_specs = [
        pl.BlockSpec((1, tq, D), lambda b, qi, ki: (b, qi, 0)),
        pl.BlockSpec((1, tkv, D), lambda b, qi, ki: (b, ki, 0)),
        pl.BlockSpec((1, tkv, D), lambda b, qi, ki: (b, ki, 0)),
    ]
    args = [q3, k3, v3]
    if bias is not None:
        in_specs.append(pl.BlockSpec((1, 1, tkv), lambda b, qi, ki: (b, 0, ki)))
        args.append(bias)

    approx_recip = bool(out_dtype == jnp.bfloat16)
    kernel = functools.partial(_attention_kernel, heads=heads, dk=dk,
                               has_mask=bias is not None,
                               approx_recip=approx_recip)

    est = (2 * tq * D * isz              # Q double buffer
           + 4 * tkv * D * isz           # K + V double buffers
           + 2 * tq * D * isz            # output double buffer
           + heads * tq * (dk + 2) * 4   # m / l / acc scratch
           + 2 * tkv * 4)                # mask bias

    return pl.pallas_call(
        kernel,
        out_shape=jax.ShapeDtypeStruct((B, Sq, D), out_dtype),
        grid=grid,
        in_specs=in_specs,
        out_specs=pl.BlockSpec((1, tq, D), lambda b, qi, ki: (b, qi, 0)),
        scratch_shapes=[
            pltpu.VMEM((heads, tq, 1), jnp.float32),    # running max
            pltpu.VMEM((heads, tq, 1), jnp.float32),    # running denominator
            pltpu.VMEM((heads, tq, dk), jnp.float32),   # running numerator
        ],
        compiler_params=pltpu.CompilerParams(
            dimension_semantics=("parallel", "parallel", "arbitrary"),
            vmem_limit_bytes=_vmem_limit(est)),
    )(*args)


# ----------------------------------------------------------------------------
# Parameters
# ----------------------------------------------------------------------------
def init_mha_params(key, d_model):
    """Deterministic init mimicking nn.Linear (uniform +/- 1/sqrt(fan_in)).
    Weights stored as (D_in, D_out), i.e. transposed vs. PyTorch."""
    bound = 1.0 / math.sqrt(d_model)
    keys = jax.random.split(key, 8)

    def lin(kw, kb):
        w = jax.random.uniform(kw, (d_model, d_model), jnp.float32, -bound, bound)
        b = jax.random.uniform(kb, (d_model,), jnp.float32, -bound, bound)
        return w, b

    wq, bq = lin(keys[0], keys[1])
    wk, bk = lin(keys[2], keys[3])
    wv, bv = lin(keys[4], keys[5])
    wo, bo = lin(keys[6], keys[7])
    return dict(wq=wq, bq=bq, wk=wk, bk=bk, wv=wv, bv=bv, wo=wo, bo=bo)


def prepare_kernel_params(params, heads, precision="fp32"):
    """One-time constant transforms (free at init):
       * fold 1/sqrt(d_k) into the Q projection weight and bias,
       * pre-cast MXU weights to bf16 when precision == "bf16" (halves DMA).
    Biases stay f32 (added to the f32 accumulator)."""
    d_model = params["wq"].shape[0]
    dk = d_model // heads
    scale = 1.0 / math.sqrt(dk)
    cdt = jnp.bfloat16 if precision == "bf16" else jnp.float32
    return dict(
        wq=(params["wq"] * scale).astype(cdt), bq=(params["bq"] * scale).astype(jnp.float32),
        wk=params["wk"].astype(cdt), bk=params["bk"].astype(jnp.float32),
        wv=params["wv"].astype(cdt), bv=params["bv"].astype(jnp.float32),
        wo=params["wo"].astype(cdt), bo=params["bo"].astype(jnp.float32),
    )


# ----------------------------------------------------------------------------
# MultiHeadAttention forward (glue in plain JAX, hot paths in Pallas)
# ----------------------------------------------------------------------------
def mha_forward(kparams, q, k, v, heads, mask=None):
    """kparams: output of prepare_kernel_params (bf16 weights => bf16 MXU path
    with f32 accumulation; f32 weights => PyTorch-matching f32 numerics)."""
    compute_dtype = kparams["wq"].dtype
    B, Sq, D = q.shape
    Sk = k.shape[1]

    # ---- projections (activation cast once, outside the kernels) ------------
    xq = q.reshape(B * Sq, D).astype(compute_dtype)
    if (q is k) and (k is v):
        # Self-attention: one kernel reads x once and emits Q, K, V.
        # (Identity check only; equal-but-distinct arrays fall back to the
        #  separate-projection path — a perf, not correctness, difference.)
        q2d, k2d, v2d = pallas_fused_linears(
            xq,
            [(kparams["wq"], kparams["bq"]),
             (kparams["wk"], kparams["bk"]),
             (kparams["wv"], kparams["bv"])],
            out_dtype=compute_dtype)
    else:
        (q2d,) = pallas_fused_linears(xq, [(kparams["wq"], kparams["bq"])],
                                      out_dtype=compute_dtype)
        xk = k.reshape(B * Sk, D).astype(compute_dtype)
        if k is v:
            k2d, v2d = pallas_fused_linears(
                xk, [(kparams["wk"], kparams["bk"]), (kparams["wv"], kparams["bv"])],
                out_dtype=compute_dtype)
        else:
            xv = v.reshape(B * Sk, D).astype(compute_dtype)
            (k2d,) = pallas_fused_linears(xk, [(kparams["wk"], kparams["bk"])],
                                          out_dtype=compute_dtype)
            (v2d,) = pallas_fused_linears(xv, [(kparams["wv"], kparams["bv"])],
                                          out_dtype=compute_dtype)

    # Free reshapes only — heads stay folded in the last dim; no transposes.
    q3 = q2d.reshape(B, Sq, D)
    k3 = k2d.reshape(B, Sk, D)
    v3 = v2d.reshape(B, Sk, D)

    # ---- mask -> tiny additive f32 bias (never a dense (B,H,Sq,Sk) mask) ----
    bias = None
    if mask is not None:
        m = mask
        if m.ndim == 3 and m.shape[1] == 1:
            m = m[:, 0, :]
        if m.ndim != 2:
            # TODO(synk): full (B, Sq, Sk) masks need a (1, tq, tkv) bias BlockSpec.
            raise NotImplementedError("only key-padding masks of shape (B, S_k) supported")
        bias = jnp.where(m != 0, 0.0, -1e9).astype(jnp.float32).reshape(B, 1, Sk)

    # ---- attention (flash-style, blocked over KV) ----------------------------
    attn = pallas_attention(q3, k3, v3, heads=heads, bias=bias)   # (B, Sq, D)

    # ---- output projection (input already in concat-head layout) ------------
    (out2d,) = pallas_fused_linears(attn.reshape(B * Sq, D),
                                    [(kparams["wo"], kparams["bo"])],
                                    out_dtype=jnp.float32)
    return out2d.reshape(B, Sq, D)


# ----------------------------------------------------------------------------
# Pure-JAX reference (PyTorch semantics, for verification)
# ----------------------------------------------------------------------------
def mha_reference(params, q, k, v, heads, mask=None):
    B, Sq, D = q.shape
    Sk = k.shape[1]
    dk = D // heads

    def proj(x, w, b, s):
        return (x @ w + b).reshape(B, s, heads, dk).transpose(0, 2, 1, 3)

    qp = proj(q, params["wq"], params["bq"], Sq)
    kp = proj(k, params["wk"], params["bk"], Sk)
    vp = proj(v, params["wv"], params["bv"], Sk)
    scores = jnp.einsum("bhqd,bhkd->bhqk", qp, kp) / math.sqrt(dk)
    if mask is not None:
        m = mask.astype(jnp.float32)
        if m.ndim == 2:
            m = m[:, None, None, :]
        scores = jnp.where(m == 0, -1e9, scores)
    p = jax.nn.softmax(scores, axis=-1)
    attn = jnp.einsum("bhqk,bhkd->bhqd", p, vp)
    concat = attn.transpose(0, 2, 1, 3).reshape(B, Sq, D)
    return concat @ params["wo"] + params["bo"]


# ----------------------------------------------------------------------------
if __name__ == "__main__":
    B, S, heads, d_model = 2, 8, 4, 32

    key = jax.random.PRNGKey(0)
    kp_, kx, kq2, kk2, kv2 = jax.random.split(key, 5)
    params = init_mha_params(kp_, d_model)
    kparams_f32 = prepare_kernel_params(params, heads, precision="fp32")
    kparams_bf16 = prepare_kernel_params(params, heads, precision="bf16")

    # 1) self-attention, fp32, no mask (fused QKV projection path)
    x = jax.random.normal(kx, (B, S, d_model), jnp.float32)
    out = jax.block_until_ready(mha_forward(kparams_f32, x, x, x, heads))
    ref = mha_reference(params, x, x, x, heads)
    assert out.shape == (B, S, d_model)
    assert jnp.allclose(out, ref, atol=1e-4, rtol=1e-4), "self-attention (fp32) mismatch"

    # 2) self-attention, fp32, key-padding mask
    mask = jnp.array([[1, 1, 1, 1, 1, 1, 1, 1],
                      [1, 1, 1, 1, 1, 0, 0, 0]], dtype=jnp.int32)
    out_m = jax.block_until_ready(mha_forward(kparams_f32, x, x, x, heads, mask=mask))
    ref_m = mha_reference(params, x, x, x, heads, mask=mask)
    assert jnp.allclose(out_m, ref_m, atol=1e-4, rtol=1e-4), "masked self-attention mismatch"

    # 3) cross-attention, fp32 (separate projections, Sq != Sk)
    Skv = 16
    q3 = jax.random.normal(kq2, (B, S, d_model), jnp.float32)
    k3 = jax.random.normal(kk2, (B, Skv, d_model), jnp.float32)
    v3 = jax.random.normal(kv2, (B, Skv, d_model), jnp.float32)
    out_x = jax.block_until_ready(mha_forward(kparams_f32, q3, k3, v3, heads))
    ref_x = mha_reference(params, q3, k3, v3, heads)
    assert jnp.allclose(out_x, ref_x, atol=1e-4, rtol=1e-4), "cross-attention mismatch"

    # 4) self-attention, bf16 MXU inputs + f32 accumulation (looser tolerance)
    out_bf = jax.block_until_ready(mha_forward(kparams_bf16, x, x, x, heads))
    assert jnp.allclose(out_bf, ref, atol=5e-2, rtol=5e-2), "bf16 path mismatch"

    print("KERNEL_OK")
</pallas_src>

<mosaic_0001>
module attributes {stable_mosaic.version = 11 : i64} {
  func.func @_fused_linear_kernel(%arg0: i32, %arg1: i32, %arg2: i32, %arg3: memref<16x32xf32, #tpu.memory_space<vmem>>, %arg4: memref<32x32xf32, #tpu.memory_space<vmem>>, %arg5: memref<32x32xf32, #tpu.memory_space<vmem>>, %arg6: memref<32x32xf32, #tpu.memory_space<vmem>>, %arg7: memref<1x32xf32, #tpu.memory_space<vmem>>, %arg8: memref<1x32xf32, #tpu.memory_space<vmem>>, %arg9: memref<1x32xf32, #tpu.memory_space<vmem>>, %arg10: memref<16x32xf32, #tpu.memory_space<vmem>>, %arg11: memref<16x32xf32, #tpu.memory_space<vmem>>, %arg12: memref<16x32xf32, #tpu.memory_space<vmem>>, %arg13: memref<16x32xf32, #tpu.memory_space<vmem>>, %arg14: memref<16x32xf32, #tpu.memory_space<vmem>>, %arg15: memref<16x32xf32, #tpu.memory_space<vmem>>) attributes {dimension_semantics = [#tpu.dimension_semantics<parallel>, #tpu.dimension_semantics<parallel>, #tpu.dimension_semantics<arbitrary>], iteration_bounds = array<i64: 1, 1, 1>, scalar_prefetch = 0 : i64, scratch_operands = 3 : i64, tpu.core_type = #tpu.core_type<tc>, window_params = [{transform_indices = @transform_0, window_bounds = array<i64: 16, 32>}, {transform_indices = @transform_1, window_bounds = array<i64: 32, 32>}, {transform_indices = @transform_2, window_bounds = array<i64: 32, 32>}, {transform_indices = @transform_3, window_bounds = array<i64: 32, 32>}, {transform_indices = @transform_4, window_bounds = array<i64: 1, 32>}, {transform_indices = @transform_5, window_bounds = array<i64: 1, 32>}, {transform_indices = @transform_6, window_bounds = array<i64: 1, 32>}, {transform_indices = @transform_7, window_bounds = array<i64: 16, 32>}, {transform_indices = @transform_8, window_bounds = array<i64: 16, 32>}, {transform_indices = @transform_9, window_bounds = array<i64: 16, 32>}]} {
    %c0_i32 = arith.constant 0 : i32
    %0 = arith.cmpi eq, %arg2, %c0_i32 : i32
    %1 = arith.extui %0 : i1 to i32
    %c0_i32_0 = arith.constant 0 : i32
    %2 = arith.cmpi ne, %1, %c0_i32_0 : i32
    scf.if %2 {
      %cst_24 = arith.constant 0.000000e+00 : f32
      %22 = vector.broadcast %cst_24 : f32 to vector<16x32xf32>
      %c0_25 = arith.constant 0 : index
      %c0_26 = arith.constant 0 : index
      %23 = vector.load %arg13[%c0_25, %c0_26] : memref<16x32xf32, #tpu.memory_space<vmem>>, vector<16x32xf32>
      tpu.vector_store %arg13[%c0_25, %c0_26], %22 {strides = array<i32>} : memref<16x32xf32, #tpu.memory_space<vmem>>, vector<16x32xf32>,
      %cst_27 = arith.constant 0.000000e+00 : f32
      %24 = vector.broadcast %cst_27 : f32 to vector<16x32xf32>
      %c0_28 = arith.constant 0 : index
      %c0_29 = arith.constant 0 : index
      %25 = vector.load %arg14[%c0_28, %c0_29] : memref<16x32xf32, #tpu.memory_space<vmem>>, vector<16x32xf32>
      tpu.vector_store %arg14[%c0_28, %c0_29], %24 {strides = array<i32>} : memref<16x32xf32, #tpu.memory_space<vmem>>, vector<16x32xf32>,
      %cst_30 = arith.constant 0.000000e+00 : f32
      %26 = vector.broadcast %cst_30 : f32 to vector<16x32xf32>
      %c0_31 = arith.constant 0 : index
      %c0_32 = arith.constant 0 : index
      %27 = vector.load %arg15[%c0_31, %c0_32] : memref<16x32xf32, #tpu.memory_space<vmem>>, vector<16x32xf32>
      tpu.vector_store %arg15[%c0_31, %c0_32], %26 {strides = array<i32>} : memref<16x32xf32, #tpu.memory_space<vmem>>, vector<16x32xf32>,
    } else {
    }
    %c0 = arith.constant 0 : index
    %c0_1 = arith.constant 0 : index
    %3 = vector.load %arg3[%c0, %c0_1] : memref<16x32xf32, #tpu.memory_space<vmem>>, vector<16x32xf32>
    %c0_2 = arith.constant 0 : index
    %c0_3 = arith.constant 0 : index
    %4 = vector.load %arg13[%c0_2, %c0_3] : memref<16x32xf32, #tpu.memory_space<vmem>>, vector<16x32xf32>
    %c0_4 = arith.constant 0 : index
    %c0_5 = arith.constant 0 : index
    %5 = vector.load %arg4[%c0_4, %c0_5] : memref<32x32xf32, #tpu.memory_space<vmem>>, vector<32x32xf32>
    %cst = arith.constant dense<0.000000e+00> : vector<16x32xf32>
    %6 = tpu.matmul %3, %5, %cst {dimension_numbers = #tpu.dot_dimension_numbers<[1], [0], [0], [1], [0, 0, 1, 1], [], []>} : vector<16x32xf32>, vector<32x32xf32>, vector<16x32xf32> -> vector<16x32xf32>
    %7 = arith.addf %4, %6 : vector<16x32xf32>
    %c0_6 = arith.constant 0 : index
    %c0_7 = arith.constant 0 : index
    %8 = vector.load %arg13[%c0_6, %c0_7] : memref<16x32xf32, #tpu.memory_space<vmem>>, vector<16x32xf32>
    tpu.vector_store %arg13[%c0_6, %c0_7], %7 {strides = array<i32>} : memref<16x32xf32, #tpu.memory_space<vmem>>, vector<16x32xf32>,
    %c0_8 = arith.constant 0 : index
    %c0_9 = arith.constant 0 : index
    %9 = vector.load %arg14[%c0_8, %c0_9] : memref<16x32xf32, #tpu.memory_space<vmem>>, vector<16x32xf32>
    %c0_10 = arith.constant 0 : index
    %c0_11 = arith.constant 0 : index
    %10 = vector.load %arg5[%c0_10, %c0_11] : memref<32x32xf32, #tpu.memory_space<vmem>>, vector<32x32xf32>
    %cst_12 = arith.constant dense<0.000000e+00> : vector<16x32xf32>
    %11 = tpu.matmul %3, %10, %cst_12 {dimension_numbers = #tpu.dot_dimension_numbers<[1], [0], [0], [1], [0, 0, 1, 1], [], []>} : vector<16x32xf32>, vector<32x32xf32>, vector<16x32xf32> -> vector<16x32xf32>
    %12 = arith.addf %9, %11 : vector<16x32xf32>
    %c0_13 = arith.constant 0 : index
    %c0_14 = arith.constant 0 : index
    %13 = vector.load %arg14[%c0_13, %c0_14] : memref<16x32xf32, #tpu.memory_space<vmem>>, vector<16x32xf32>
    tpu.vector_store %arg14[%c0_13, %c0_14], %12 {strides = array<i32>} : memref<16x32xf32, #tpu.memory_space<vmem>>, vector<16x32xf32>,
    %c0_15 = arith.constant 0 : index
    %c0_16 = arith.constant 0 : index
    %14 = vector.load %arg15[%c0_15, %c0_16] : memref<16x32xf32, #tpu.memory_space<vmem>>, vector<16x32xf32>
    %c0_17 = arith.constant 0 : index
    %c0_18 = arith.constant 0 : index
    %15 = vector.load %arg6[%c0_17, %c0_18] : memref<32x32xf32, #tpu.memory_space<vmem>>, vector<32x32xf32>
    %cst_19 = arith.constant dense<0.000000e+00> : vector<16x32xf32>
    %16 = tpu.matmul %3, %15, %cst_19 {dimension_numbers = #tpu.dot_dimension_numbers<[1], [0], [0], [1], [0, 0, 1, 1], [], []>} : vector<16x32xf32>, vector<32x32xf32>, vector<16x32xf32> -> vector<16x32xf32>
    %17 = arith.addf %14, %16 : vector<16x32xf32>
    %c0_20 = arith.constant 0 : index
    %c0_21 = arith.constant 0 : index
    %18 = vector.load %arg15[%c0_20, %c0_21] : memref<16x32xf32, #tpu.memory_space<vmem>>, vector<16x32xf32>
    tpu.vector_store %arg15[%c0_20, %c0_21], %17 {strides = array<i32>} : memref<16x32xf32, #tpu.memory_space<vmem>>, vector<16x32xf32>,
    %c0_i32_22 = arith.constant 0 : i32
    %19 = arith.cmpi eq, %arg2, %c0_i32_22 : i32
    %20 = arith.extui %19 : i1 to i32
    %c0_i32_23 = arith.constant 0 : i32
    %21 = arith.cmpi ne, %20, %c0_i32_23 : i32
    scf.if %21 {
      %c0_24 = arith.constant 0 : index
      %c0_25 = arith.constant 0 : index
      %22 = vector.load %arg13[%c0_24, %c0_25] : memref<16x32xf32, #tpu.memory_space<vmem>>, vector<16x32xf32>
      %c0_26 = arith.constant 0 : index
      %c0_27 = arith.constant 0 : index
      %23 = vector.load %arg7[%c0_26, %c0_27] : memref<1x32xf32, #tpu.memory_space<vmem>>, vector<1x32xf32>
      %24 = vector.broadcast %23 : vector<1x32xf32> to vector<16x32xf32>
      %25 = arith.addf %22, %24 : vector<16x32xf32>
      %c0_28 = arith.constant 0 : index
      %c0_29 = arith.constant 0 : index
      %26 = vector.load %arg10[%c0_28, %c0_29] : memref<16x32xf32, #tpu.memory_space<vmem>>, vector<16x32xf32>
      tpu.vector_store %arg10[%c0_28, %c0_29], %25 {strides = array<i32>} : memref<16x32xf32, #tpu.memory_space<vmem>>, vector<16x32xf32>,
      %c0_30 = arith.constant 0 : index
      %c0_31 = arith.constant 0 : index
      %27 = vector.load %arg14[%c0_30, %c0_31] : memref<16x32xf32, #tpu.memory_space<vmem>>, vector<16x32xf32>
      %c0_32 = arith.constant 0 : index
      %c0_33 = arith.constant 0 : index
      %28 = vector.load %arg8[%c0_32, %c0_33] : memref<1x32xf32, #tpu.memory_space<vmem>>, vector<1x32xf32>
      %29 = vector.broadcast %28 : vector<1x32xf32> to vector<16x32xf32>
      %30 = arith.addf %27, %29 : vector<16x32xf32>
      %c0_34 = arith.constant 0 : index
      %c0_35 = arith.constant 0 : index
      %31 = vector.load %arg11[%c0_34, %c0_35] : memref<16x32xf32, #tpu.memory_space<vmem>>, vector<16x32xf32>
      tpu.vector_store %arg11[%c0_34, %c0_35], %30 {strides = array<i32>} : memref<16x32xf32, #tpu.memory_space<vmem>>, vector<16x32xf32>,
      %c0_36 = arith.constant 0 : index
      %c0_37 = arith.constant 0 : index
      %32 = vector.load %arg15[%c0_36, %c0_37] : memref<16x32xf32, #tpu.memory_space<vmem>>, vector<16x32xf32>
      %c0_38 = arith.constant 0 : index
      %c0_39 = arith.constant 0 : index
      %33 = vector.load %arg9[%c0_38, %c0_39] : memref<1x32xf32, #tpu.memory_space<vmem>>, vector<1x32xf32>
      %34 = vector.broadcast %33 : vector<1x32xf32> to vector<16x32xf32>
      %35 = arith.addf %32, %34 : vector<16x32xf32>
      %c0_40 = arith.constant 0 : index
      %c0_41 = arith.constant 0 : index
      %36 = vector.load %arg12[%c0_40, %c0_41] : memref<16x32xf32, #tpu.memory_space<vmem>>, vector<16x32xf32>
      tpu.vector_store %arg12[%c0_40, %c0_41], %35 {strides = array<i32>} : memref<16x32xf32, #tpu.memory_space<vmem>>, vector<16x32xf32>,
    } else {
    }
    return
  }
  func.func @transform_0(%arg0: i32, %arg1: i32, %arg2: i32) -> (i32, i32) {
    %c0_i32 = arith.constant 0 : i32
    return %arg0, %arg2 : i32, i32
  }
  func.func @transform_1(%arg0: i32, %arg1: i32, %arg2: i32) -> (i32, i32) {
    %c0_i32 = arith.constant 0 : i32
    return %arg2, %arg1 : i32, i32
  }
  func.func @transform_2(%arg0: i32, %arg1: i32, %arg2: i32) -> (i32, i32) {
    %c0_i32 = arith.constant 0 : i32
    return %arg2, %arg1 : i32, i32
  }
  func.func @transform_3(%arg0: i32, %arg1: i32, %arg2: i32) -> (i32, i32) {
    %c0_i32 = arith.constant 0 : i32
    return %arg2, %arg1 : i32, i32
  }
  func.func @transform_4(%arg0: i32, %arg1: i32, %arg2: i32) -> (i32, i32) {
    %c0_i32 = arith.constant 0 : i32
    %c0_i32_0 = arith.constant 0 : i32
    return %c0_i32, %arg1 : i32, i32
  }
  func.func @transform_5(%arg0: i32, %arg1: i32, %arg2: i32) -> (i32, i32) {
    %c0_i32 = arith.constant 0 : i32
    %c0_i32_0 = arith.constant 0 : i32
    return %c0_i32, %arg1 : i32, i32
  }
  func.func @transform_6(%arg0: i32, %arg1: i32, %arg2: i32) -> (i32, i32) {
    %c0_i32 = arith.constant 0 : i32
    %c0_i32_0 = arith.constant 0 : i32
    return %c0_i32, %arg1 : i32, i32
  }
  func.func @transform_7(%arg0: i32, %arg1: i32, %arg2: i32) -> (i32, i32) {
    %c0_i32 = arith.constant 0 : i32
    return %arg0, %arg1 : i32, i32
  }
  func.func @transform_8(%arg0: i32, %arg1: i32, %arg2: i32) -> (i32, i32) {
    %c0_i32 = arith.constant 0 : i32
    return %arg0, %arg1 : i32, i32
  }
  func.func @transform_9(%arg0: i32, %arg1: i32, %arg2: i32) -> (i32, i32) {
    %c0_i32 = arith.constant 0 : i32
    return %arg0, %arg1 : i32, i32
  }
}

</mosaic_0001>

<llo_original>
// kernel: tpu_custom_call.1
$region0: #{tpu_custom_call.1}
  #allocation0 [shape = 'u32[]', space=smem, size = 0x4, offset = 0x4, fixed_abs, tag = 'smem constant byte address 0x4 - core index']
  #allocation1 [shape = 'u32[72,128]{1,0:T(1,128)}', space=vmem, size = 0x9000, scoped, tag = 'internal scratch']
  #allocation2 [shape = 'f32[16,32]{1,0:T(8,128)}', space=vmem, size = 0x2000, scoped, tag = 'scratch operand']
  #allocation3 [shape = 'f32[16,32]{1,0:T(8,128)}', space=vmem, size = 0x2000, scoped, tag = 'scratch operand']
  #allocation4 [shape = 'f32[16,32]{1,0:T(8,128)}', space=vmem, size = 0x2000, scoped, tag = 'scratch operand']
  %s0 = inlined_call_operand.hbm [shape: f32[16,32], index: 0, kind: input, shape index: {}]
  %s1 = inlined_call_operand.hbm [shape: f32[32,32], index: 1, kind: input, shape index: {}]
  %s2 = inlined_call_operand.hbm [shape: f32[32,32], index: 2, kind: input, shape index: {}]
  %s3 = inlined_call_operand.hbm [shape: f32[32,32], index: 3, kind: input, shape index: {}]
  %s4 = inlined_call_operand.vmem [shape: f32[1,32], index: 4, kind: input, shape index: {}]
  %s5 = inlined_call_operand.vmem [shape: f32[1,32], index: 5, kind: input, shape index: {}]
  %s6 = inlined_call_operand.vmem [shape: f32[1,32], index: 6, kind: input, shape index: {}]
  %s7 = inlined_call_operand.hbm [shape: f32[16,32], index: 7, kind: output, shape index: {0}]
  %s8 = inlined_call_operand.hbm [shape: f32[16,32], index: 8, kind: output, shape index: {1}]
  %s9 = inlined_call_operand.hbm [shape: f32[16,32], index: 9, kind: output, shape index: {2}]
  %10 = xla_tuple %s7, %s8, %s9
  %s11 = sld [smem:[#allocation0]]
  $region78: #{tpu_custom_call.1} parent=0
    _
  %s13 = ssub.s32 1, %s11
  %s14 = scalar_select 0, %s13, %s11
  $region1: #{tpu_custom_call.1} parent=0
    #allocation5 [shape = 'u8[8192]{0}', space=vmem, size = 0x2000, scoped, tag = 'input window, operand 0, single buffered']
    #allocation6 [shape = 's32[1]{0}', space=sflag, size = 0x4, scoped, tag = 'scoped memory for tpu_custom_call.1']
    #allocation7 [shape = 's32[1]{0}', space=sflag, size = 0x4, scoped, tag = 'scoped memory for tpu_custom_call.1']
    #allocation8 [shape = 'u8[16384]{0}', space=vmem, size = 0x4000, scoped, tag = 'input window, operand 1, single buffered']
    #allocation9 [shape = 's32[1]{0}', space=sflag, size = 0x4, scoped, tag = 'scoped memory for tpu_custom_call.1']
    #allocation10 [shape = 'u8[16384]{0}', space=vmem, size = 0x4000, scoped, tag = 'input window, operand 2, single buffered']
    #allocation11 [shape = 'u8[16384]{0}', space=vmem, size = 0x4000, scoped, tag = 'input window, operand 3, single buffered']
    #allocation12 [shape = 's32[1]{0}', space=sflag, size = 0x4, scoped, tag = 'scoped memory for tpu_custom_call.1']
    #allocation13 [shape = 'u8[8192]{0}', space=vmem, size = 0x2000, scoped, tag = 'output window, operand 0, single buffered']
    #allocation14 [shape = 'u8[8192]{0}', space=vmem, size = 0x2000, scoped, tag = 'output window, operand 1, single buffered']
    #allocation15 [shape = 's32[1]{0}', space=sflag, size = 0x4, scoped, tag = 'scoped memory for tpu_custom_call.1']
    #allocation16 [shape = 'u8[8192]{0}', space=vmem, size = 0x2000, scoped, tag = 'output window, operand 2, single buffered']
    %15 = vsyncpa [#allocation6], 0
    %16 = vsyncpa [#allocation9], 0
    %17 = vsyncpa [#allocation12], 0
    %18 = vsyncpa [#allocation7], 0
    %19 = vsyncpa [#allocation15], 0
    // Predicated region
    $region2: #{tpu_custom_call.1} parent=1 // pred_check
      _
    $region3: #{tpu_custom_call.1} parent=1 // pred_check_branch
      %21 = sbr.rel (0) target = $region5
    $region4: #{tpu_custom_call.1} parent=1 // pred_region
      %23 = vsyncadd [#allocation6], 0
      %s24 = sshll.u32 %s0, 4
      %s25 = int_to_ptr.hbm [resolvable:$true] %s24
      %s26 = sshll.u32 [#allocation5], 4
      %s27 = int_to_ptr.vmem [resolvable:$true] %s26
      %32 = dma.hbm_to_vmem [thread:$0]  %s25, 256, %s27, [#allocation6], 128, 128, 8
    $region5: #{tpu_custom_call.1} parent=1 // pred_fallthru
      _
    // Predicated region
    $region6: #{tpu_custom_call.1} parent=1 // pred_check
      _
    $region7: #{tpu_custom_call.1} parent=1 // pred_check_branch
      %34 = sbr.rel (0) target = $region9
    $region8: #{tpu_custom_call.1} parent=1 // pred_region
      %36 = vsyncadd [#allocation9], 0
      %s37 = sshll.u32 %s1, 4
      %s38 = int_to_ptr.hbm [resolvable:$true] %s37
      %s39 = sshll.u32 [#allocation8], 4
      %s40 = int_to_ptr.vmem [resolvable:$true] %s39
      %45 = dma.hbm_to_vmem [thread:$0]  %s38, 512, %s40, [#allocation9], 128, 128, 8
    $region9: #{tpu_custom_call.1} parent=1 // pred_fallthru
      _
    // Predicated region
    $region10: #{tpu_custom_call.1} parent=1 // pred_check
      _
    $region11: #{tpu_custom_call.1} parent=1 // pred_check_branch
      %47 = sbr.rel (0) target = $region13
    $region12: #{tpu_custom_call.1} parent=1 // pred_region
      %49 = vsyncadd [#allocation9], 0
      %s50 = sshll.u32 %s2, 4
      %s51 = int_to_ptr.hbm [resolvable:$true] %s50
      %s52 = sshll.u32 [#allocation10], 4
      %s53 = int_to_ptr.vmem [resolvable:$true] %s52
      %58 = dma.hbm_to_vmem [thread:$0]  %s51, 512, %s53, [#allocation9], 128, 128, 8
    $region13: #{tpu_custom_call.1} parent=1 // pred_fallthru
      _
    // Predicated region
    $region14: #{tpu_custom_call.1} parent=1 // pred_check
      _
    $region15: #{tpu_custom_call.1} parent=1 // pred_check_branch
      %60 = sbr.rel (0) target = $region17
    $region16: #{tpu_custom_call.1} parent=1 // pred_region
      %62 = vsyncadd [#allocation12], 0
      %s63 = sshll.u32 %s3, 4
      %s64 = int_to_ptr.hbm [resolvable:$true] %s63
      %s65 = sshll.u32 [#allocation11], 4
      %s66 = int_to_ptr.vmem [resolvable:$true] %s65
      %71 = dma.hbm_to_vmem [thread:$0]  %s64, 512, %s66, [#allocation12], 128, 128, 8
    $region17: #{tpu_custom_call.1} parent=1 // pred_fallthru
      _
    // Predicated region
    $region18: #{tpu_custom_call.1} parent=1 // pred_check
      _
    $region19: #{tpu_custom_call.1} parent=1 // pred_check_branch
      %73 = sbr.rel (0) target = $region21
    $region20: #{tpu_custom_call.1} parent=1 // pred_region
      _
    $region21: #{tpu_custom_call.1} parent=1 // pred_fallthru
      _
    // Predicated region
    $region22: #{tpu_custom_call.1} parent=1 // pred_check
      _
    $region23: #{tpu_custom_call.1} parent=1 // pred_check_branch
      %75 = sbr.rel (0) target = $region25
    $region24: #{tpu_custom_call.1} parent=1 // pred_region
      _
    $region25: #{tpu_custom_call.1} parent=1 // pred_fallthru
      _
    // Predicated region
    $region26: #{tpu_custom_call.1} parent=1 // pred_check
      _
    $region27: #{tpu_custom_call.1} parent=1 // pred_check_branch
      %77 = sbr.rel (0) target = $region29
    $region28: #{tpu_custom_call.1} parent=1 // pred_region
      _
    $region29: #{tpu_custom_call.1} parent=1 // pred_fallthru
      _
    // Predicated region
    $region30: #{tpu_custom_call.1} parent=1 // pred_check
      _
    $region31: #{tpu_custom_call.1} parent=1 // pred_check_branch
      %79 = sbr.rel (0) target = $region33
    $region32: #{tpu_custom_call.1} parent=1 // pred_region
      %81 = dma.done [#allocation6], 256
    $region33: #{tpu_custom_call.1} parent=1 // pred_fallthru
      _
    // Predicated region
    $region34: #{tpu_custom_call.1} parent=1 // pred_check
      _
    $region35: #{tpu_custom_call.1} parent=1 // pred_check_branch
      %83 = sbr.rel (0) target = $region37
    $region36: #{tpu_custom_call.1} parent=1 // pred_region
      %85 = dma.done [#allocation9], 512
    $region37: #{tpu_custom_call.1} parent=1 // pred_fallthru
      _
    // Predicated region
    $region38: #{tpu_custom_call.1} parent=1 // pred_check
      _
    $region39: #{tpu_custom_call.1} parent=1 // pred_check_branch
      %87 = sbr.rel (0) target = $region41
    $region40: #{tpu_custom_call.1} parent=1 // pred_region
      %89 = dma.done [#allocation9], 512
    $region41: #{tpu_custom_call.1} parent=1 // pred_fallthru
      _
    // Predicated region
    $region42: #{tpu_custom_call.1} parent=1 // pred_check
      _
    $region43: #{tpu_custom_call.1} parent=1 // pred_check_branch
      %91 = sbr.rel (0) target = $region45
    $region44: #{tpu_custom_call.1} parent=1 // pred_region
      %93 = dma.done [#allocation12], 512
    $region45: #{tpu_custom_call.1} parent=1 // pred_fallthru
      _
    %p94 = scmp.eq.s32.totalorder 0, 0
    // Predicated region
    $region46: #{tpu_custom_call.1} parent=1 // pred_check
      %p95 = pneg %p94
    $region47: #{tpu_custom_call.1} parent=1 // pred_check_branch
      %97 = sbr.rel (%p95) target = $region49
    $region48: #{tpu_custom_call.1} parent=1 // pred_region
      %vm98 = vcmask 261120
      %99 = vst.msk [vmem:[#allocation2] sm:$0xff] %vm98, 0.0
      %100 = vst.msk [vmem:[#allocation2 + $0x8] sm:$0xff] %vm98, 0.0
      %101 = vst.msk [vmem:[#allocation3] sm:$0xff] %vm98, 0.0
      %102 = vst.msk [vmem:[#allocation3 + $0x8] sm:$0xff] %vm98, 0.0
      %103 = vst.msk [vmem:[#allocation4] sm:$0xff] %vm98, 0.0
      %104 = vst.msk [vmem:[#allocation4 + $0x8] sm:$0xff] %vm98, 0.0
    $region49: #{tpu_custom_call.1} parent=1 // pred_fallthru
      _
    %v105 = vld [vmem:[#allocation5] sm:$0xff]
    %v106 = vld [vmem:[#allocation5 + $0x8] sm:$0xff]
    %v107 = vld [vmem:[#allocation2] sm:$0xff]
    %v108 = vld [vmem:[#allocation2 + $0x8] sm:$0xff]
    %v109 = vld [vmem:[#allocation8] sm:$0xff]
    %v110 = vld [vmem:[#allocation8 + $0x8] sm:$0xff]
    %v111 = vld [vmem:[#allocation8 + $0x10] sm:$0xff]
    %v112 = vld [vmem:[#allocation8 + $0x18] sm:$0xff]
    %vm113 = vcmask 261120
    %v115 = vsel %vm113, %v105, 0
    %v118 = vsel %vm113, %v106, 0
    %120 = vmatpush.msra.mxu0 0.0
    %121 = vmatpush.msra.mxu0 0.0
    %122 = vmatpush.msra.mxu0 0.0
    %123 = vmatpush.msra.mxu0 0.0
    %124 = vmatpush.msra.mxu0 0.0
    %125 = vmatpush.msra.mxu0 0.0
    %126 = vmatpush.msra.mxu0 0.0
    %127 = vmatpush.msra.mxu0 0.0
    %128 = vmatpush.msra.mxu0 0.0
    %129 = vmatpush.msra.mxu0 0.0
    %130 = vmatpush.msra.mxu0 0.0
    %131 = vmatpush.msra.mxu0 0.0
    %132 = vmatpush.msra.mxu0 %v112
    %133 = vmatpush.msra.mxu0 %v111
    %134 = vmatpush.msra.mxu0 %v110
    %135 = vmatpush.msra.mxu0 %v109
    %136 = vmatmul.f32.gmra.mxu0 %v115
    %v137 = vpop.f32.mrf.mxu0
    %v138 = vadd.f32 0.0, %v137
    %139 = vmatmul.f32.gmra.mxu0 %v118
    %v140 = vpop.f32.mrf.mxu0
    %v141 = vadd.f32 0.0, %v140
    %142 = vdwg.mxu0
    %v143 = vadd.f32 %v107, %v138
    %v144 = vadd.f32 %v108, %v141
    %145 = vst.msk [vmem:[#allocation2] sm:$0xff] %vm113, %v143
    %146 = vst.msk [vmem:[#allocation2 + $0x8] sm:$0xff] %vm113, %v144
    %v147 = vld [vmem:[#allocation3] sm:$0xff]
    %v148 = vld [vmem:[#allocation3 + $0x8] sm:$0xff]
    %v149 = vld [vmem:[#allocation10] sm:$0xff]
    %v150 = vld [vmem:[#allocation10 + $0x8] sm:$0xff]
    %v151 = vld [vmem:[#allocation10 + $0x10] sm:$0xff]
    %v152 = vld [vmem:[#allocation10 + $0x18] sm:$0xff]
    %153 = vmatpush.msra.mxu0 0.0
    %154 = vmatpush.msra.mxu0 0.0
    %155 = vmatpush.msra.mxu0 0.0
    %156 = vmatpush.msra.mxu0 0.0
    %157 = vmatpush.msra.mxu0 0.0
    %158 = vmatpush.msra.mxu0 0.0
    %159 = vmatpush.msra.mxu0 0.0
    %160 = vmatpush.msra.mxu0 0.0
    %161 = vmatpush.msra.mxu0 0.0
    %162 = vmatpush.msra.mxu0 0.0
    %163 = vmatpush.msra.mxu0 0.0
    %164 = vmatpush.msra.mxu0 0.0
    %165 = vmatpush.msra.mxu0 %v152
    %166 = vmatpush.msra.mxu0 %v151
    %167 = vmatpush.msra.mxu0 %v150
    %168 = vmatpush.msra.mxu0 %v149
    %169 = vmatmul.f32.gmra.mxu0 %v115
    %v170 = vpop.f32.mrf.mxu0
    %v171 = vadd.f32 0.0, %v170
    %172 = vmatmul.f32.gmra.mxu0 %v118
    %v173 = vpop.f32.mrf.mxu0
    %v174 = vadd.f32 0.0, %v173
    %175 = vdwg.mxu0
    %v176 = vadd.f32 %v147, %v171
    %v177 = vadd.f32 %v148, %v174
    %178 = vst.msk [vmem:[#allocation3] sm:$0xff] %vm113, %v176
    %179 = vst.msk [vmem:[#allocation3 + $0x8] sm:$0xff] %vm113, %v177
    %v180 = vld [vmem:[#allocation4] sm:$0xff]
    %v181 = vld [vmem:[#allocation4 + $0x8] sm:$0xff]
    %v182 = vld [vmem:[#allocation11] sm:$0xff]
    %v183 = vld [vmem:[#allocation11 + $0x8] sm:$0xff]
    %v184 = vld [vmem:[#allocation11 + $0x10] sm:$0xff]
    %v185 = vld [vmem:[#allocation11 + $0x18] sm:$0xff]
    %186 = vmatpush.msra.mxu0 0.0
    %187 = vmatpush.msra.mxu0 0.0
    %188 = vmatpush.msra.mxu0 0.0
    %189 = vmatpush.msra.mxu0 0.0
    %190 = vmatpush.msra.mxu0 0.0
    %191 = vmatpush.msra.mxu0 0.0
    %192 = vmatpush.msra.mxu0 0.0
    %193 = vmatpush.msra.mxu0 0.0
    %194 = vmatpush.msra.mxu0 0.0
    %195 = vmatpush.msra.mxu0 0.0
    %196 = vmatpush.msra.mxu0 0.0
    %197 = vmatpush.msra.mxu0 0.0
    %198 = vmatpush.msra.mxu0 %v185
    %199 = vmatpush.msra.mxu0 %v184
    %200 = vmatpush.msra.mxu0 %v183
    %201 = vmatpush.msra.mxu0 %v182
    %202 = vmatmul.f32.gmra.mxu0 %v115
    %v203 = vpop.f32.mrf.mxu0
    %v204 = vadd.f32 0.0, %v203
    %205 = vmatmul.f32.gmra.mxu0 %v118
    %v206 = vpop.f32.mrf.mxu0
    %v207 = vadd.f32 0.0, %v206
    %208 = vdwg.mxu0
    %v209 = vadd.f32 %v180, %v204
    %v210 = vadd.f32 %v181, %v207
    %211 = vst.msk [vmem:[#allocation4] sm:$0xff] %vm113, %v209
    %212 = vst.msk [vmem:[#allocation4 + $0x8] sm:$0xff] %vm113, %v210
    // Predicated region
    $region50: #{tpu_custom_call.1} parent=1 // pred_check
      %p213 = pneg %p94
    $region51: #{tpu_custom_call.1} parent=1 // pred_check_branch
      %215 = sbr.rel (%p213) target = $region53
    $region52: #{tpu_custom_call.1} parent=1 // pred_region
      %v216 = vld [vmem:[#allocation2] sm:$0xff]
      %v217 = vld [vmem:[#allocation2 + $0x8] sm:$0xff]
      %v218 = vld [vmem:[%s4] sm:$0x1]
      %v220 = vperm.slane %v218, 0
      %v222 = vadd.f32 %v216, %v220
      %v223 = vadd.f32 %v217, %v220
      %224 = vst.msk [vmem:[#allocation13] sm:$0xff] %vm113, %v222
      %225 = vst.msk [vmem:[#allocation13 + $0x8] sm:$0xff] %vm113, %v223
      %v226 = vld [vmem:[#allocation3] sm:$0xff]
      %v227 = vld [vmem:[#allocation3 + $0x8] sm:$0xff]
      %v228 = vld [vmem:[%s5] sm:$0x1]
      %v230 = vperm.slane %v228, 0
      %v232 = vadd.f32 %v226, %v230
      %v233 = vadd.f32 %v227, %v230
      %234 = vst.msk [vmem:[#allocation14] sm:$0xff] %vm113, %v232
      %235 = vst.msk [vmem:[#allocation14 + $0x8] sm:$0xff] %vm113, %v233
      %v236 = vld [vmem:[#allocation4] sm:$0xff]
      %v237 = vld [vmem:[#allocation4 + $0x8] sm:$0xff]
      %v238 = vld [vmem:[%s6] sm:$0x1]
      %v240 = vperm.slane %v238, 0
      %v242 = vadd.f32 %v236, %v240
      %v243 = vadd.f32 %v237, %v240
      %244 = vst.msk [vmem:[#allocation16] sm:$0xff] %vm113, %v242
      %245 = vst.msk [vmem:[#allocation16 + $0x8] sm:$0xff] %vm113, %v243
    $region53: #{tpu_custom_call.1} parent=1 // pred_fallthru
      _
    // Predicated region
    $region54: #{tpu_custom_call.1} parent=1 // pred_check
      _
    $region55: #{tpu_custom_call.1} parent=1 // pred_check_branch
      %247 = sbr.rel (0) target = $region57
    $region56: #{tpu_custom_call.1} parent=1 // pred_region
      %249 = vsyncadd [#allocation7], 0
      %s250 = sshll.u32 [#allocation13], 4
      %s251 = int_to_ptr.vmem [resolvable:$true] %s250
      %s252 = sshll.u32 %s7, 4
      %s253 = int_to_ptr.hbm [resolvable:$true] %s252
      %258 = dma.vmem_to_hbm [thread:$0]  %s251, 256, %s253, [#allocation7], 128, 128, 8
    $region57: #{tpu_custom_call.1} parent=1 // pred_fallthru
      _
    // Predicated region
    $region58: #{tpu_custom_call.1} parent=1 // pred_check
      _
    $region59: #{tpu_custom_call.1} parent=1 // pred_check_branch
      %260 = sbr.rel (0) target = $region61
    $region60: #{tpu_custom_call.1} parent=1 // pred_region
      %262 = vsyncadd [#allocation15], 0
      %s263 = sshll.u32 [#allocation14], 4
      %s264 = int_to_ptr.vmem [resolvable:$true] %s263
      %s265 = sshll.u32 %s8, 4
      %s266 = int_to_ptr.hbm [resolvable:$true] %s265
      %271 = dma.vmem_to_hbm [thread:$0]  %s264, 256, %s266, [#allocation15], 128, 128, 8
    $region61: #{tpu_custom_call.1} parent=1 // pred_fallthru
      _
    // Predicated region
    $region62: #{tpu_custom_call.1} parent=1 // pred_check
      _
    $region63: #{tpu_custom_call.1} parent=1 // pred_check_branch
      %273 = sbr.rel (0) target = $region65
    $region64: #{tpu_custom_call.1} parent=1 // pred_region
      %275 = vsyncadd [#allocation15], 0
      %s276 = sshll.u32 [#allocation16], 4
      %s277 = int_to_ptr.vmem [resolvable:$true] %s276
      %s278 = sshll.u32 %s9, 4
      %s279 = int_to_ptr.hbm [resolvable:$true] %s278
      %284 = dma.vmem_to_hbm [thread:$0]  %s277, 256, %s279, [#allocation15], 128, 128, 8
    $region65: #{tpu_custom_call.1} parent=1 // pred_fallthru
      _
    // Predicated region
    $region66: #{tpu_custom_call.1} parent=1 // pred_check
      _
    $region67: #{tpu_custom_call.1} parent=1 // pred_check_branch
      %286 = sbr.rel (0) target = $region69
    $region68: #{tpu_custom_call.1} parent=1 // pred_region
      %288 = dma.done [#allocation7], 256
    $region69: #{tpu_custom_call.1} parent=1 // pred_fallthru
      _
    // Predicated region
    $region70: #{tpu_custom_call.1} parent=1 // pred_check
      _
    $region71: #{tpu_custom_call.1} parent=1 // pred_check_branch
      %290 = sbr.rel (0) target = $region73
    $region72: #{tpu_custom_call.1} parent=1 // pred_region
      %292 = dma.done [#allocation15], 256
    $region73: #{tpu_custom_call.1} parent=1 // pred_fallthru
      _
    // Predicated region
    $region74: #{tpu_custom_call.1} parent=1 // pred_check
      _
    $region75: #{tpu_custom_call.1} parent=1 // pred_check_branch
      %294 = sbr.rel (0) target = $region77
    $region76: #{tpu_custom_call.1} parent=1 // pred_region
      %296 = dma.done [#allocation15], 256
    $region77: #{tpu_custom_call.1} parent=1 // pred_fallthru
      _
    %297 = vsyncpa [#allocation6], 1
    %298 = vsyncpa [#allocation9], 1
    %299 = vsyncpa [#allocation12], 1
    %300 = vsyncpa [#allocation7], 1
    %301 = vsyncpa [#allocation15], 1

</llo_original>
